<compile_context>
chip_gen: v7x
topology: tpu7x:2x2x1
jax: 0.10.0
libtpu: 0.0.40
codegen_flags: <defaults>
</compile_context>

<pallas_src>
import functools

import jax
import jax.numpy as jnp
from jax.experimental import pallas as pl
from jax.experimental.pallas import tpu as pltpu


def _round_up(x, m):
    return ((x + m - 1) // m) * m


# ----------------------------------------------------------------------------
# Pallas kernel: one GCN propagation layer, row-tiled over A.
#   out_tile = post( d_tile ⊙ (A_tile @ M) + b )
# where post = relu (+ extra d-scale for layer 1) or identity (layer 2).
# ----------------------------------------------------------------------------
def _gcn_layer_kernel(a_ref, m_ref, d_ref, b_ref, o_ref, *, apply_relu, post_scale):
    # A_tile: [tm, Np] bf16 (raw 0/1/2 adjacency), M: [Np, Fp] bf16 (resident)
    z = jnp.dot(a_ref[...], m_ref[...], preferred_element_type=jnp.float32)  # [tm, Fp] f32
    d = d_ref[...]                                                           # [tm, 1]  f32
    y = d * z + b_ref[...]                                                   # f32 VPU (free under MXU)
    if apply_relu:
        y = jnp.maximum(y, 0.0)
    if post_scale:                      # layer 1: emit d ⊙ H so layer 2 needs no inner d
        y = d * y
    o_ref[...] = y.astype(o_ref.dtype)


def _gcn_layer(a_pad, m, d_col, b, *, apply_relu, post_scale, tm=128):
    n_p = a_pad.shape[0]
    f_p = m.shape[1]
    grid = (n_p // tm,)

    # Resident-footprint-sized scoped VMEM limit (defaults are 16/32 MiB).
    footprint = (2 * tm * n_p * a_pad.dtype.itemsize   # A tiles, double-buffered (bf16)
                 + n_p * f_p * m.dtype.itemsize        # M, whole-resident (bf16)
                 + 2 * tm * 128 * 4                    # d column tiles (lane-padded)
                 + 8 * f_p * 4                         # bias
                 + 2 * tm * f_p * 4)                   # output tiles, double-buffered (f32)
    vmem_limit = int(min(max(footprint + (4 << 20), 16 << 20), 100 << 20))

    kernel = functools.partial(_gcn_layer_kernel,
                               apply_relu=apply_relu, post_scale=post_scale)
    return pl.pallas_call(
        kernel,
        out_shape=jax.ShapeDtypeStruct((n_p, f_p), jnp.float32),
        grid=grid,
        in_specs=[
            pl.BlockSpec((tm, n_p), lambda i: (i, 0)),   # A: streamed bf16 row tiles
            pl.BlockSpec((n_p, f_p), lambda i: (0, 0)),  # M: whole-resident bf16
            pl.BlockSpec((tm, 1), lambda i: (i, 0)),     # d column, per-tile slice
            pl.BlockSpec((1, f_p), lambda i: (0, 0)),    # bias, resident
        ],
        out_specs=pl.BlockSpec((tm, f_p), lambda i: (i, 0)),
        compiler_params=pltpu.CompilerParams(
            dimension_semantics=("parallel",),
            vmem_limit_bytes=vmem_limit,
        ),
    )(a_pad, m, d_col, b)


# ----------------------------------------------------------------------------
# Encoder forward: relu(GCNConv1(x)) -> GCNConv2
# ----------------------------------------------------------------------------
def gcn_encoder_pallas(a_pad, d_pad, x, w1, b1, w2, b2, num_nodes):
    n = num_nodes
    n_p = a_pad.shape[0]
    cin = x.shape[1]
    hid, cout = w1.shape[1], w2.shape[1]
    hid_p = _round_up(hid, 128)    # lane-dense outputs, no 256 over-padding
    cout_p = _round_up(cout, 128)

    # lane/sublane padding of the small operands (all O(N·feat) or O(feat^2))
    x_p = jnp.zeros((n_p, cin), jnp.float32).at[:n, :].set(x)
    w1_p = jnp.zeros((cin, hid_p), jnp.float32).at[:, :hid].set(w1)
    b1_p = jnp.zeros((1, hid_p), jnp.float32).at[:, :hid].set(b1)
    w2_p = jnp.zeros((hid_p, cout_p), jnp.float32).at[:hid, :cout].set(w2)
    b2_p = jnp.zeros((1, cout_p), jnp.float32).at[:, :cout].set(b2)

    d_col = d_pad[:, None]                                        # [n_p, 1] f32 (tiled in kernel)

    # layer 1: Hd = d ⊙ relu( d ⊙ (A @ ((d ⊙ X) @ W1)) + b1 )
    m1 = ((d_col * x_p) @ w1_p).astype(jnp.bfloat16)              # [n_p, hid_p], tiny XLA matmul
    hd = _gcn_layer(a_pad, m1, d_col, b1_p, apply_relu=True, post_scale=True)

    # layer 2: OUT = d ⊙ (A @ (Hd @ W2)) + b2
    m2 = (hd @ w2_p).astype(jnp.bfloat16)                         # [n_p, cout_p], tiny XLA matmul
    out_p = _gcn_layer(a_pad, m2, d_col, b2_p, apply_relu=False, post_scale=False)

    return out_p[:n, :cout]


# ----------------------------------------------------------------------------
# Plain-JAX glue: dense (A + I) built directly at padded shape, in bf16, plus
# the d^-1/2 vector (gcn_norm pieces).
# TODO(synk): true sparse scatter-based message passing (SparseGCNConv /
# edge_index gather-scatter) has no clean Pallas equivalent here; we use a
# dense padded adjacency, which matches GCNConv semantics for simple graphs.
# ----------------------------------------------------------------------------
def build_dense_adj_padded(edge_index, num_nodes, n_pad):
    row, col = edge_index[0], edge_index[1]
    adj = jnp.zeros((n_pad, n_pad), jnp.bfloat16)
    # .set dedups duplicate edges; test graph is simple and has no self-loops,
    # so this matches torch_geometric gcn_norm(add_self_loops=True) exactly.
    adj = adj.at[row, col].set(1.0)
    diag = jnp.arange(num_nodes)
    adj = adj.at[diag, diag].add(1.0)                 # self-loops (A + I); 0/1/2 exact in bf16
    deg = jnp.sum(adj[:num_nodes, :num_nodes].astype(jnp.float32), axis=1)
    d_inv_sqrt = jnp.where(deg > 0, jax.lax.rsqrt(deg), 0.0)
    d_pad = jnp.zeros((n_pad,), jnp.float32).at[:num_nodes].set(d_inv_sqrt)
    return adj, d_pad


def glorot(key, shape):
    fan_in, fan_out = shape
    limit = jnp.sqrt(6.0 / (fan_in + fan_out))
    return jax.random.uniform(key, shape, jnp.float32, -limit, limit)


def encoder_reference(adj_f32, d_inv_sqrt, x, w1, b1, w2, b2):
    a_hat = d_inv_sqrt[:, None] * adj_f32 * d_inv_sqrt[None, :]
    h = jnp.maximum(a_hat @ (x @ w1) + b1, 0.0)
    return a_hat @ (h @ w2) + b2


if __name__ == "__main__":
    # small shapes consistent with the module (exercises a 2-tile row grid)
    num_nodes = 200
    in_channels = 8
    hidden_channels = 32
    out_channels = 16

    key = jax.random.PRNGKey(0)
    k_x, k_w1, k_w2 = jax.random.split(key, 3)

    # deterministic node features
    x = jax.random.normal(k_x, (num_nodes, in_channels), jnp.float32)

    # deterministic undirected edge set (ring + a few chords), both directions
    src = jnp.arange(num_nodes, dtype=jnp.int32)
    dst = (src + 1) % num_nodes
    chords_s = jnp.array([0, 50, 100, 150], dtype=jnp.int32)
    chords_d = jnp.array([77, 123, 9, 31], dtype=jnp.int32)
    row = jnp.concatenate([src, dst, chords_s, chords_d])
    col = jnp.concatenate([dst, src, chords_d, chords_s])
    edge_index = jnp.stack([row, col])                        # [2, E]

    # parameters (glorot weights, zero bias — matches GCNConv.reset_parameters)
    w1 = glorot(k_w1, (in_channels, hidden_channels))
    b1 = jnp.zeros((1, hidden_channels), jnp.float32)
    w2 = glorot(k_w2, (hidden_channels, out_channels))
    b2 = jnp.zeros((1, out_channels), jnp.float32)

    n_pad = _round_up(num_nodes, 128)
    adj_pad, d_pad = build_dense_adj_padded(edge_index, num_nodes, n_pad)

    out = gcn_encoder_pallas(adj_pad, d_pad, x, w1, b1, w2, b2, num_nodes)
    out = jax.block_until_ready(out)

    ref = encoder_reference(adj_pad[:num_nodes, :num_nodes].astype(jnp.float32),
                            d_pad[:num_nodes], x, w1, b1, w2, b2)
    assert out.shape == (num_nodes, out_channels)
    # bf16 MXU inputs (A is exact 0/1/2; only M is bf16-rounded) with f32 acc
    assert jnp.allclose(out, ref, atol=5e-2, rtol=5e-2), "mismatch vs reference"

    print("KERNEL_OK")
</pallas_src>

<mosaic_0001>
module attributes {stable_mosaic.version = 11 : i64} {
  func.func @_gcn_layer_kernel(%arg0: i32, %arg1: memref<128x256xbf16, #tpu.memory_space<vmem>>, %arg2: memref<256x128xbf16, #tpu.memory_space<vmem>>, %arg3: memref<128x1xf32, #tpu.memory_space<vmem>>, %arg4: memref<1x128xf32, #tpu.memory_space<vmem>>, %arg5: memref<128x128xf32, #tpu.memory_space<vmem>>) attributes {dimension_semantics = [#tpu.dimension_semantics<parallel>], iteration_bounds = array<i64: 2>, scalar_prefetch = 0 : i64, scratch_operands = 0 : i64, tpu.core_type = #tpu.core_type<tc>, window_params = [{transform_indices = @transform_0, window_bounds = array<i64: 128, 256>}, {pipeline_mode = #tpu.pipeline_mode<synchronous>, transform_indices = @transform_1, window_bounds = array<i64: 256, 128>}, {transform_indices = @transform_2, window_bounds = array<i64: 128, 1>}, {pipeline_mode = #tpu.pipeline_mode<synchronous>, transform_indices = @transform_3, window_bounds = array<i64: 1, 128>}, {transform_indices = @transform_4, window_bounds = array<i64: 128, 128>}]} {
    %c0 = arith.constant 0 : index
    %c0_0 = arith.constant 0 : index
    %0 = vector.load %arg1[%c0, %c0_0] : memref<128x256xbf16, #tpu.memory_space<vmem>>, vector<128x256xbf16>
    %c0_1 = arith.constant 0 : index
    %c0_2 = arith.constant 0 : index
    %1 = vector.load %arg2[%c0_1, %c0_2] : memref<256x128xbf16, #tpu.memory_space<vmem>>, vector<256x128xbf16>
    %cst = arith.constant dense<0.000000e+00> : vector<128x128xf32>
    %2 = tpu.matmul %0, %1, %cst {dimension_numbers = #tpu.dot_dimension_numbers<[1], [0], [0], [1], [0, 0, 1, 1], [], []>} : vector<128x256xbf16>, vector<256x128xbf16>, vector<128x128xf32> -> vector<128x128xf32>
    %c0_3 = arith.constant 0 : index
    %c0_4 = arith.constant 0 : index
    %3 = vector.load %arg3[%c0_3, %c0_4] : memref<128x1xf32, #tpu.memory_space<vmem>>, vector<128x1xf32>
    %4 = vector.broadcast %3 : vector<128x1xf32> to vector<128x128xf32>
    %5 = arith.mulf %4, %2 : vector<128x128xf32>
    %c0_5 = arith.constant 0 : index
    %c0_6 = arith.constant 0 : index
    %6 = vector.load %arg4[%c0_5, %c0_6] : memref<1x128xf32, #tpu.memory_space<vmem>>, vector<1x128xf32>
    %7 = vector.broadcast %6 : vector<1x128xf32> to vector<128x128xf32>
    %8 = arith.addf %5, %7 : vector<128x128xf32>
    %cst_7 = arith.constant 0.000000e+00 : f32
    %9 = vector.broadcast %cst_7 : f32 to vector<128x128xf32>
    %10 = arith.maximumf %8, %9 : vector<128x128xf32>
    %11 = vector.broadcast %3 : vector<128x1xf32> to vector<128x128xf32>
    %12 = arith.mulf %11, %10 : vector<128x128xf32>
    %c0_8 = arith.constant 0 : index
    %c0_9 = arith.constant 0 : index
    %13 = vector.load %arg5[%c0_8, %c0_9] : memref<128x128xf32, #tpu.memory_space<vmem>>, vector<128x128xf32>
    tpu.vector_store %arg5[%c0_8, %c0_9], %12 {strides = array<i32>} : memref<128x128xf32, #tpu.memory_space<vmem>>, vector<128x128xf32>,
    return
  }
  func.func @transform_0(%arg0: i32) -> (i32, i32) {
    %c0_i32 = arith.constant 0 : i32
    %c0_i32_0 = arith.constant 0 : i32
    return %arg0, %c0_i32 : i32, i32
  }
  func.func @transform_1(%arg0: i32) -> (i32, i32) {
    %c0_i32 = arith.constant 0 : i32
    %c0_i32_0 = arith.constant 0 : i32
    %c0_i32_1 = arith.constant 0 : i32
    return %c0_i32, %c0_i32_0 : i32, i32
  }
  func.func @transform_2(%arg0: i32) -> (i32, i32) {
    %c0_i32 = arith.constant 0 : i32
    %c0_i32_0 = arith.constant 0 : i32
    return %arg0, %c0_i32 : i32, i32
  }
  func.func @transform_3(%arg0: i32) -> (i32, i32) {
    %c0_i32 = arith.constant 0 : i32
    %c0_i32_0 = arith.constant 0 : i32
    %c0_i32_1 = arith.constant 0 : i32
    return %c0_i32, %c0_i32_0 : i32, i32
  }
  func.func @transform_4(%arg0: i32) -> (i32, i32) {
    %c0_i32 = arith.constant 0 : i32
    %c0_i32_0 = arith.constant 0 : i32
    return %arg0, %c0_i32 : i32, i32
  }
}

</mosaic_0001>

<llo_original>
// kernel: tpu_custom_call.1
$region0: #{tpu_custom_call.1}
  #allocation0 [shape = 'u32[]', space=smem, size = 0x4, offset = 0x4, fixed_abs, tag = 'smem constant byte address 0x4 - core index']
  #allocation1 [shape = 'u32[144,128]{1,0:T(1,128)}', space=vmem, size = 0x12000, scoped, tag = 'internal scratch']
  %s0 = inlined_call_operand.vmem [shape: bf16[256,256], index: 0, kind: input, shape index: {}]
  %s1 = inlined_call_operand.hbm [shape: bf16[256,128], index: 1, kind: input, shape index: {}]
  %s2 = inlined_call_operand.vmem [shape: f32[256,1], index: 2, kind: input, shape index: {}]
  %s3 = inlined_call_operand.vmem [shape: f32[1,128], index: 3, kind: input, shape index: {}]
  %s4 = inlined_call_operand.hbm [shape: f32[256,128], index: 4, kind: output, shape index: {}]
  %s5 = sld [smem:[#allocation0]]
  $region53: #{tpu_custom_call.1} parent=0
    _
  %s7 = ssub.s32 1, %s5
  %s8 = scalar_select 0, %s7, %s5
  $region1: #{tpu_custom_call.1} parent=0
    #allocation2 [shape = 'u8[65536]{0}', space=vmem, size = 0x10000, scoped, tag = 'input window, operand 1, single buffered']
    #allocation3 [shape = 's32[2]{0}', space=sflag, size = 0x8, scoped, tag = 'scoped memory for tpu_custom_call.1']
    #allocation4 [shape = 's32[2]{0}', space=sflag, size = 0x8, scoped, tag = 'scoped memory for tpu_custom_call.1']
    #allocation5 [shape = 'u8[131072]{0}', space=vmem, size = 0x20000, scoped, tag = 'output window, operand 0']
    %9 = vsyncpa [#allocation3], 0
    %10 = vsyncpa [#allocation4], 0
    %s11 = scalar_lea.sflag [#allocation4], 1
    %12 = vsyncpa %s11, 0
    loop: start=0, step=1, limit=4
    $region2: #{tpu_custom_call.1} parent=1 // loop_pre_header
      _
    $region3: #{tpu_custom_call.1} parent=1 // loop_header
      %s14 = sphi 0, %s18
      %p15 = scmp.ge.s32.totalorder %s14, 4
      %s24 = sphi 0, %s26
      %s27 = sphi 0, %s24
      %s28 = sphi 0, %s27
      %s44 = sphi 0, %s28
      %s48 = sphi 0, %s48
      %s50 = sphi 0, %s48
      %s51 = sphi 0, %s50
      %s65 = sphi 0, %s51
      %s71 = sphi 0, %s73
      %s74 = sphi 0, %s71
      %s75 = sphi 0, %s74
      %s91 = sphi 0, %s75
      %s95 = sphi 0, %s95
      %s97 = sphi 0, %s95
      %s98 = sphi 0, %s97
      %s112 = sphi 0, %s98
      %s118 = sphi 0, %s120
      %s121 = sphi 0, %s118
      %s122 = sphi 0, %s121
      %s138 = sphi 0, %s122
    $region4: #{tpu_custom_call.1} parent=1 // loop_header_branch
      %17 = sbr.rel (%p15) target = $region8
    $region5: #{tpu_custom_call.1} parent=1 // loop_body
      %s19 = ssub.s32 %s14, 1
      %s20 = ssub.s32 %s14, 2
      %s21 = sadd.s32 %s14, 1
      %s22 = ssub.s32 %s14, %s21
      %p23 = scmp.eq.s32.totalorder %s22, 0
      %s25 = sadd.s32 %s24, 1
      %s26 = scalar_select %p23, %s24, %s25
      %p29 = pneg %p23
      %p30 = scmp.eq.s32.totalorder %s14, 1
      %p31 = por %p29, %p30
      %p32 = scmp.ne.s32.totalorder %s24, %s27
      %p33 = scmp.eq.s32.totalorder %s14, 0
      %p34 = por %p32, %p33
      %p35 = scmp.ne.s32.totalorder %s24, %s27
      %p36 = scmp.eq.s32.totalorder %s19, 1
      %p37 = por %p35, %p36
      %p38 = scmp.ne.s32.totalorder %s27, %s28
      %p39 = scmp.eq.s32.totalorder %s19, 0
      %p40 = por %p38, %p39
      %p41 = scmp.ne.s32.totalorder %s27, %s28
      %p42 = scmp.eq.s32.totalorder %s20, 1
      %p43 = por %p41, %p42
      %p45 = scmp.ne.s32.totalorder %s28, %s44
      %p46 = scmp.eq.s32.totalorder %s20, 0
      %p47 = por %p45, %p46
      %s49 = sadd.s32 %s48, 1
      %p52 = scmp.eq.s32.totalorder %s14, 1
      %p53 = scmp.ne.s32.totalorder %s48, %s50
      %p54 = scmp.eq.s32.totalorder %s14, 0
      %p55 = por %p53, %p54
      %p56 = scmp.ne.s32.totalorder %s48, %s50
      %p57 = scmp.eq.s32.totalorder %s19, 1
      %p58 = por %p56, %p57
      %p59 = scmp.ne.s32.totalorder %s50, %s51
      %p60 = scmp.eq.s32.totalorder %s19, 0
      %p61 = por %p59, %p60
      %p62 = scmp.ne.s32.totalorder %s50, %s51
      %p63 = scmp.eq.s32.totalorder %s20, 1
      %p64 = por %p62, %p63
      %p66 = scmp.ne.s32.totalorder %s51, %s65
      %p67 = scmp.eq.s32.totalorder %s20, 0
      %p68 = por %p66, %p67
      %s69 = ssub.s32 %s14, %s21
      %p70 = scmp.eq.s32.totalorder %s69, 0
      %s72 = sadd.s32 %s71, 1
      %s73 = scalar_select %p70, %s71, %s72
      %p76 = pneg %p70
      %p77 = scmp.eq.s32.totalorder %s14, 1
      %p78 = por %p76, %p77
      %p79 = scmp.ne.s32.totalorder %s71, %s74
      %p80 = scmp.eq.s32.totalorder %s14, 0
      %p81 = por %p79, %p80
      %p82 = scmp.ne.s32.totalorder %s71, %s74
      %p83 = scmp.eq.s32.totalorder %s19, 1
      %p84 = por %p82, %p83
      %p85 = scmp.ne.s32.totalorder %s74, %s75
      %p86 = scmp.eq.s32.totalorder %s19, 0
      %p87 = por %p85, %p86
      %p88 = scmp.ne.s32.totalorder %s74, %s75
      %p89 = scmp.eq.s32.totalorder %s20, 1
      %p90 = por %p88, %p89
      %p92 = scmp.ne.s32.totalorder %s75, %s91
      %p93 = scmp.eq.s32.totalorder %s20, 0
      %p94 = por %p92, %p93
      %s96 = sadd.s32 %s95, 1
      %p99 = scmp.eq.s32.totalorder %s14, 1
      %p100 = scmp.ne.s32.totalorder %s95, %s97
      %p101 = scmp.eq.s32.totalorder %s14, 0
      %p102 = por %p100, %p101
      %p103 = scmp.ne.s32.totalorder %s95, %s97
      %p104 = scmp.eq.s32.totalorder %s19, 1
      %p105 = por %p103, %p104
      %p106 = scmp.ne.s32.totalorder %s97, %s98
      %p107 = scmp.eq.s32.totalorder %s19, 0
      %p108 = por %p106, %p107
      %p109 = scmp.ne.s32.totalorder %s97, %s98
      %p110 = scmp.eq.s32.totalorder %s20, 1
      %p111 = por %p109, %p110
      %p113 = scmp.ne.s32.totalorder %s98, %s112
      %p114 = scmp.eq.s32.totalorder %s20, 0
      %p115 = por %p113, %p114
      %s116 = ssub.s32 %s14, %s21
      %p117 = scmp.eq.s32.totalorder %s116, 0
      %s119 = sadd.s32 %s118, 1
      %s120 = scalar_select %p117, %s118, %s119
      %p123 = pneg %p117
      %p124 = scmp.eq.s32.totalorder %s14, 1
      %p125 = por %p123, %p124
      %p126 = scmp.ne.s32.totalorder %s118, %s121
      %p127 = scmp.eq.s32.totalorder %s14, 0
      %p128 = por %p126, %p127
      %p129 = scmp.ne.s32.totalorder %s118, %s121
      %p130 = scmp.eq.s32.totalorder %s19, 1
      %p131 = por %p129, %p130
      %p132 = scmp.ne.s32.totalorder %s121, %s122
      %p133 = scmp.eq.s32.totalorder %s19, 0
      %p134 = por %p132, %p133
      %p135 = scmp.ne.s32.totalorder %s121, %s122
      %p136 = scmp.eq.s32.totalorder %s20, 1
      %p137 = por %p135, %p136
      %p139 = scmp.ne.s32.totalorder %s122, %s138
      %p140 = scmp.eq.s32.totalorder %s20, 0
      %p141 = por %p139, %p140
      %p142 = scmp.le.s32.totalorder 1, %s14
      %p143 = scmp.lt.s32.totalorder %s14, 3
      %p144 = pnand %p142, %p143
      %p145 = pneg %p144
      // Predicated region
      $region9: #{tpu_custom_call.1} parent=5 // pred_check
        _
      $region10: #{tpu_custom_call.1} parent=5 // pred_check_branch
        %147 = sbr.rel (%p144) target = $region12
      $region11: #{tpu_custom_call.1} parent=5 // pred_region
        %s148 = ssub.s32 %s14, 1
        // Predicated region
        $region13: #{tpu_custom_call.1} parent=11 // pred_check
          %p149 = pneg %p61
        $region14: #{tpu_custom_call.1} parent=11 // pred_check_branch
          %151 = sbr.rel (%p149) target = $region16
        $region15: #{tpu_custom_call.1} parent=11 // pred_region
          %s153 = ssub.s32 2048, 2048
          %154 = vsyncadd [#allocation3], %s153
          %s155 = sshll.u32 [#allocation2], 4
          %s156 = int_to_ptr.vmem [resolvable:$true] %s155
          %161 = dma.hbm_to_vmem [thread:$0]  %s1, 2048, %s156, [#allocation3], 64, 64, 4
        $region16: #{tpu_custom_call.1} parent=11 // pred_fallthru
          _
        // Predicated region
        $region17: #{tpu_custom_call.1} parent=11 // pred_check
          %p162 = pneg %p108
        $region18: #{tpu_custom_call.1} parent=11 // pred_check_branch
          %164 = sbr.rel (%p162) target = $region20
        $region19: #{tpu_custom_call.1} parent=11 // pred_region
          _
        $region20: #{tpu_custom_call.1} parent=11 // pred_fallthru
          _
      $region12: #{tpu_custom_call.1} parent=5 // pred_fallthru
        _
      %p165 = scmp.lt.s32.totalorder %s14, 2
      // Predicated region
      $region21: #{tpu_custom_call.1} parent=5 // pred_check
        %p166 = pneg %p165
      $region22: #{tpu_custom_call.1} parent=5 // pred_check_branch
        %168 = sbr.rel (%p166) target = $region24
      $region23: #{tpu_custom_call.1} parent=5 // pred_region
        // Predicated region
        $region25: #{tpu_custom_call.1} parent=23 // pred_check
          %p169 = pneg %p34
        $region26: #{tpu_custom_call.1} parent=23 // pred_check_branch
          %171 = sbr.rel (%p169) target = $region28
        $region27: #{tpu_custom_call.1} parent=23 // pred_region
          %s172 = smul.u32 16, %s14
          %p173 = scmp.lt.s32.totalorder %s172, 31
          %s174 = scalar_select %p173, %s172, 31
          %s175 = smul.addr %s174, 2
          %s176 = smul.addr %s175, 4
          %s177 = scalar_lea.vmem %s0, %s176
          %s178 = smul.u32 16, %s14
        $region28: #{tpu_custom_call.1} parent=23 // pred_fallthru
          _
        // Predicated region
        $region29: #{tpu_custom_call.1} parent=23 // pred_check
          %p179 = pneg %p81
        $region30: #{tpu_custom_call.1} parent=23 // pred_check_branch
          %181 = sbr.rel (%p179) target = $region32
        $region31: #{tpu_custom_call.1} parent=23 // pred_region
          %s182 = smul.u32 16, %s14
          %p183 = scmp.lt.s32.totalorder %s182, 31
          %s184 = scalar_select %p183, %s182, 31
          %s185 = smul.addr %s184, 8
          %s186 = scalar_lea.vmem %s2, %s185
          %s187 = smul.u32 16, %s14
        $region32: #{tpu_custom_call.1} parent=23 // pred_fallthru
          _
      $region24: #{tpu_custom_call.1} parent=5 // pred_fallthru
        _
      %p188 = scmp.le.s32.totalorder 1, %s14
      %p189 = scmp.lt.s32.totalorder %s14, 3
      %p190 = pnand %p188, %p189
      %p191 = pneg %p190
      // Predicated region
      $region33: #{tpu_custom_call.1} parent=5 // pred_check
        _
      $region34: #{tpu_custom_call.1} parent=5 // pred_check_branch
        %193 = sbr.rel (%p190) target = $region36
      $region35: #{tpu_custom_call.1} parent=5 // pred_region
        %s194 = ssub.s32 %s14, 1
        // Predicated region
        $region37: #{tpu_custom_call.1} parent=35 // pred_check
          %p195 = pneg %p61
        $region38: #{tpu_custom_call.1} parent=35 // pred_check_branch
          %197 = sbr.rel (%p195) target = $region40
        $region39: #{tpu_custom_call.1} parent=35 // pred_region
          %198 = dma.done [#allocation3], 2048
        $region40: #{tpu_custom_call.1} parent=35 // pred_fallthru
          _
        %s199 = smul.u32 16, %s19
        %p200 = scmp.lt.s32.totalorder %s199, 31
        %s201 = scalar_select %p200, %s199, 31
        %s202 = smul.addr %s201, 2
        %s203 = smul.addr %s202, 4
        %s204 = scalar_lea.vmem %s0, %s203
        %p205 = pneg %p40
        %p206 = pneg %p37
        %p207 = pneg %p61
        %p208 = pneg %p58
        %s209 = smul.u32 16, %s19
        %p210 = scmp.lt.s32.totalorder %s209, 31
        %s211 = scalar_select %p210, %s209, 31
        %s212 = smul.addr %s211, 8
        %s213 = scalar_lea.vmem %s2, %s212
        %p214 = pneg %p87
        %p215 = pneg %p84
        %p216 = pneg %p108
        %p217 = pneg %p105
        %p218 = pneg %p134
        %p219 = pneg %p131
        %s220 = sand.u32 %s121, 1
        %s221 = scalar_lea.sflag [#allocation4], %s220
        %s222 = sand.u32 %s121, 1
        %s223 = smul.addr %s222, 128
        %s224 = scalar_lea.vmem [#allocation5], %s223
        %s225 = smul.u32 16, %s19
        %p226 = scmp.lt.s32.totalorder %s225, 31
        %s227 = scalar_select %p226, %s225, 31
        %s228 = smul.addr %s227, 2
        %s229 = smul.addr %s228, 4
        %s230 = scalar_lea.vmem %s0, %s229
        %s231 = smul.u32 16, %s19
        %s232 = smul.u32 16, %s19
        %p233 = scmp.lt.s32.totalorder %s232, 31
        %s234 = scalar_select %p233, %s232, 31
        %s235 = smul.addr %s234, 8
        %s236 = scalar_lea.vmem %s2, %s235
        %s237 = smul.u32 16, %s19
        %s238 = smul.u32 16, %s19
        %v240 = vld [vmem:[%s230] sm:$0xff]
        %v241 = vld [vmem:[%s230 + $0x8] sm:$0xff]
        %v242 = vld [vmem:[%s230 + $0x10] sm:$0xff]
        %v243 = vld [vmem:[%s230 + $0x18] sm:$0xff]
        %v244 = vld [vmem:[%s230 + $0x20] sm:$0xff]
        %v245 = vld [vmem:[%s230 + $0x28] sm:$0xff]
        %v246 = vld [vmem:[%s230 + $0x30] sm:$0xff]
        %v247 = vld [vmem:[%s230 + $0x38] sm:$0xff]
        %v248 = vld [vmem:[%s230 + $0x40] sm:$0xff]
        %v249 = vld [vmem:[%s230 + $0x48] sm:$0xff]
        %v250 = vld [vmem:[%s230 + $0x50] sm:$0xff]
        %v251 = vld [vmem:[%s230 + $0x58] sm:$0xff]
        %v252 = vld [vmem:[%s230 + $0x60] sm:$0xff]
        %v253 = vld [vmem:[%s230 + $0x68] sm:$0xff]
        %v254 = vld [vmem:[%s230 + $0x70] sm:$0xff]
        %v255 = vld [vmem:[%s230 + $0x78] sm:$0xff]
        %v256 = vld [vmem:[#allocation2] sm:$0xf]
        %v257 = vld [vmem:[#allocation2 + $0x4] sm:$0xf]
        %v258 = vld [vmem:[#allocation2 + $0x8] sm:$0xf]
        %v259 = vld [vmem:[#allocation2 + $0xc] sm:$0xf]
        %v260 = vld [vmem:[#allocation2 + $0x10] sm:$0xf]
        %v261 = vld [vmem:[#allocation2 + $0x14] sm:$0xf]
        %v262 = vld [vmem:[#allocation2 + $0x18] sm:$0xf]
        %v263 = vld [vmem:[#allocation2 + $0x1c] sm:$0xf]
        %v264 = vld [vmem:[#allocation2 + $0x20] sm:$0xf]
        %v265 = vld [vmem:[#allocation2 + $0x24] sm:$0xf]
        %v266 = vld [vmem:[#allocation2 + $0x28] sm:$0xf]
        %v267 = vld [vmem:[#allocation2 + $0x2c] sm:$0xf]
        %v268 = vld [vmem:[#allocation2 + $0x30] sm:$0xf]
        %v269 = vld [vmem:[#allocation2 + $0x34] sm:$0xf]
        %v270 = vld [vmem:[#allocation2 + $0x38] sm:$0xf]
        %v271 = vld [vmem:[#allocation2 + $0x3c] sm:$0xf]
        %v272 = vld [vmem:[#allocation2 + $0x40] sm:$0xf]
        %v273 = vld [vmem:[#allocation2 + $0x44] sm:$0xf]
        %v274 = vld [vmem:[#allocation2 + $0x48] sm:$0xf]
        %v275 = vld [vmem:[#allocation2 + $0x4c] sm:$0xf]
        %v276 = vld [vmem:[#allocation2 + $0x50] sm:$0xf]
        %v277 = vld [vmem:[#allocation2 + $0x54] sm:$0xf]
        %v278 = vld [vmem:[#allocation2 + $0x58] sm:$0xf]
        %v279 = vld [vmem:[#allocation2 + $0x5c] sm:$0xf]
        %v280 = vld [vmem:[#allocation2 + $0x60] sm:$0xf]
        %v281 = vld [vmem:[#allocation2 + $0x64] sm:$0xf]
        %v282 = vld [vmem:[#allocation2 + $0x68] sm:$0xf]
        %v283 = vld [vmem:[#allocation2 + $0x6c] sm:$0xf]
        %v284 = vld [vmem:[#allocation2 + $0x70] sm:$0xf]
        %v285 = vld [vmem:[#allocation2 + $0x74] sm:$0xf]
        %v286 = vld [vmem:[#allocation2 + $0x78] sm:$0xf]
        %v287 = vld [vmem:[#allocation2 + $0x7c] sm:$0xf]
        %v304 = vunpack.c.l.b16 %v240
        %v305 = vunpack.c.h.b16 %v240
        %v306 = vunpack.c.l.b16 %v241
        %v307 = vunpack.c.h.b16 %v241
        %v308 = vunpack.c.l.b16 %v242
        %v309 = vunpack.c.h.b16 %v242
        %v310 = vunpack.c.l.b16 %v243
        %v311 = vunpack.c.h.b16 %v243
        %v312 = vunpack.c.l.b16 %v244
        %v313 = vunpack.c.h.b16 %v244
        %v314 = vunpack.c.l.b16 %v245
        %v315 = vunpack.c.h.b16 %v245
        %v316 = vunpack.c.l.b16 %v246
        %v317 = vunpack.c.h.b16 %v246
        %v318 = vunpack.c.l.b16 %v247
        %v319 = vunpack.c.h.b16 %v247
        %v320 = vunpack.c.l.b16 %v248
        %v321 = vunpack.c.h.b16 %v248
        %v322 = vunpack.c.l.b16 %v249
        %v323 = vunpack.c.h.b16 %v249
        %v324 = vunpack.c.l.b16 %v250
        %v325 = vunpack.c.h.b16 %v250
        %v326 = vunpack.c.l.b16 %v251
        %v327 = vunpack.c.h.b16 %v251
        %v328 = vunpack.c.l.b16 %v252
        %v329 = vunpack.c.h.b16 %v252
        %v330 = vunpack.c.l.b16 %v253
        %v331 = vunpack.c.h.b16 %v253
        %v332 = vunpack.c.l.b16 %v254
        %v333 = vunpack.c.h.b16 %v254
        %v334 = vunpack.c.l.b16 %v255
        %v335 = vunpack.c.h.b16 %v255
        %v336 = vpack.c.b16 %v306, %v304
        %v337 = vpack.c.b16 %v307, %v305
        %v338 = vpack.c.b16 %v310, %v308
        %v339 = vpack.c.b16 %v311, %v309
        %v340 = vpack.c.b16 %v314, %v312
        %v341 = vpack.c.b16 %v315, %v313
        %v342 = vpack.c.b16 %v318, %v316
        %v343 = vpack.c.b16 %v319, %v317
        %v344 = vpack.c.b16 %v322, %v320
        %v345 = vpack.c.b16 %v323, %v321
        %v346 = vpack.c.b16 %v326, %v324
        %v347 = vpack.c.b16 %v327, %v325
        %v348 = vpack.c.b16 %v330, %v328
        %v349 = vpack.c.b16 %v331, %v329
        %v350 = vpack.c.b16 %v334, %v332
        %v351 = vpack.c.b16 %v335, %v333
        %v400 = vunpack.c.l.b16 %v256
        %v401 = vunpack.c.l.b16 %v257
        %v402 = vunpack.c.l.b16 %v258
        %v403 = vunpack.c.l.b16 %v259
        %v404 = vunpack.c.l.b16 %v260
        %v405 = vunpack.c.l.b16 %v261
        %v406 = vunpack.c.l.b16 %v262
        %v407 = vunpack.c.l.b16 %v263
        %v408 = vunpack.c.l.b16 %v264
        %v409 = vunpack.c.l.b16 %v265
        %v410 = vunpack.c.l.b16 %v266
        %v411 = vunpack.c.l.b16 %v267
        %v412 = vunpack.c.l.b16 %v268
        %v413 = vunpack.c.l.b16 %v269
        %v414 = vunpack.c.l.b16 %v270
        %v415 = vunpack.c.l.b16 %v271
        %v416 = vunpack.c.l.b16 %v272
        %v417 = vunpack.c.l.b16 %v273
        %v418 = vunpack.c.l.b16 %v274
        %v419 = vunpack.c.l.b16 %v275
        %v420 = vunpack.c.l.b16 %v276
        %v421 = vunpack.c.l.b16 %v277
        %v422 = vunpack.c.l.b16 %v278
        %v423 = vunpack.c.l.b16 %v279
        %v424 = vunpack.c.l.b16 %v280
        %v425 = vunpack.c.l.b16 %v281
        %v426 = vunpack.c.l.b16 %v282
        %v427 = vunpack.c.l.b16 %v283
        %v428 = vunpack.c.l.b16 %v284
        %v429 = vunpack.c.l.b16 %v285
        %v430 = vunpack.c.l.b16 %v286
        %v431 = vunpack.c.l.b16 %v287
        %v432 = vpack.c.b16 %v401, %v400
        %v433 = vpack.c.b16 %v403, %v402
        %v434 = vpack.c.b16 %v405, %v404
        %v435 = vpack.c.b16 %v407, %v406
        %v436 = vpack.c.b16 %v409, %v408
        %v437 = vpack.c.b16 %v411, %v410
        %v438 = vpack.c.b16 %v413, %v412
        %v439 = vpack.c.b16 %v415, %v414
        %v440 = vpack.c.b16 %v417, %v416
        %v441 = vpack.c.b16 %v419, %v418
        %v442 = vpack.c.b16 %v421, %v420
        %v443 = vpack.c.b16 %v423, %v422
        %v444 = vpack.c.b16 %v425, %v424
        %v445 = vpack.c.b16 %v427, %v426
        %v446 = vpack.c.b16 %v429, %v428
        %v447 = vpack.c.b16 %v431, %v430
        %464 = vmatprep.subr.bf16.mxu0 0
        %465 = vmatpush1.bf16.msra.mxu0 %v432
        %466 = vmatprep.subr.bf16.mxu0 0
        %467 = vmatpush1.bf16.msra.mxu0 %v433
        %468 = vmatprep.subr.bf16.mxu0 0
        %469 = vmatpush1.bf16.msra.mxu0 %v434
        %470 = vmatprep.subr.bf16.mxu0 0
        %471 = vmatpush1.bf16.msra.mxu0 %v435
        %472 = vmatprep.subr.bf16.mxu0 0
        %473 = vmatpush1.bf16.msra.mxu0 %v436
        %474 = vmatprep.subr.bf16.mxu0 0
        %475 = vmatpush1.bf16.msra.mxu0 %v437
        %476 = vmatprep.subr.bf16.mxu0 0
        %477 = vmatpush1.bf16.msra.mxu0 %v438
        %478 = vmatprep.subr.bf16.mxu0 0
        %479 = vmatpush1.bf16.msra.mxu0 %v439
        %480 = vmatprep.subr.bf16.mxu0 0
        %481 = vmatpush1.bf16.msra.mxu0 %v440
        %482 = vmatprep.subr.bf16.mxu0 0
        %483 = vmatpush1.bf16.msra.mxu0 %v441
        %484 = vmatprep.subr.bf16.mxu0 0
        %485 = vmatpush1.bf16.msra.mxu0 %v442
        %486 = vmatprep.subr.bf16.mxu0 0
        %487 = vmatpush1.bf16.msra.mxu0 %v443
        %488 = vmatprep.subr.bf16.mxu0 0
        %489 = vmatpush1.bf16.msra.mxu0 %v444
        %490 = vmatprep.subr.bf16.mxu0 0
        %491 = vmatpush1.bf16.msra.mxu0 %v445
        %492 = vmatprep.subr.bf16.mxu0 0
        %493 = vmatpush1.bf16.msra.mxu0 %v446
        %494 = vmatprep.subr.bf16.mxu0 0
        %495 = vmatpush1.bf16.msra.mxu0 %v447
        %496 = vmatprep.mubr.bf16.mxu0 %v337
        %497 = vmatmul.mubr.bf16.gmra.mrb[0].mxu0 %v336
        %v498 = vpop.f32.mrb[0].mxu0
        %v499 = vadd.f32 0.0, %v498
        %v500 = vpop.f32.mrb[0].mxu0
        %v501 = vpop.f32.mrb[0].mxu0
        %v502 = vadd.f32 0.0, %v501
        %v503 = vpop.f32.mrb[0].mxu0
        %504 = vmatprep.mubr.bf16.mxu0 %v339
        %505 = vmatmul.mubr.bf16.gmra.mrb[0].mxu0 %v338
        %v506 = vpop.f32.mrb[0].mxu0
        %v507 = vadd.f32 0.0, %v506
        %v508 = vpop.f32.mrb[0].mxu0
        %v509 = vpop.f32.mrb[0].mxu0
        %v510 = vadd.f32 0.0, %v509
        %v511 = vpop.f32.mrb[0].mxu0
        %512 = vmatprep.mubr.bf16.mxu0 %v341
        %513 = vmatmul.mubr.bf16.gmra.mrb[0].mxu0 %v340
        %v514 = vpop.f32.mrb[0].mxu0
        %v515 = vadd.f32 0.0, %v514
        %v516 = vpop.f32.mrb[0].mxu0
        %v517 = vpop.f32.mrb[0].mxu0
        %v518 = vadd.f32 0.0, %v517
        %v519 = vpop.f32.mrb[0].mxu0
        %520 = vmatprep.mubr.bf16.mxu0 %v343
        %521 = vmatmul.mubr.bf16.gmra.mrb[0].mxu0 %v342
        %v522 = vpop.f32.mrb[0].mxu0
        %v523 = vadd.f32 0.0, %v522
        %v524 = vpop.f32.mrb[0].mxu0
        %v525 = vpop.f32.mrb[0].mxu0
        %v526 = vadd.f32 0.0, %v525
        %v527 = vpop.f32.mrb[0].mxu0
        %528 = vmatprep.mubr.bf16.mxu0 %v345
        %529 = vmatmul.mubr.bf16.gmra.mrb[0].mxu0 %v344
        %v530 = vpop.f32.mrb[0].mxu0
        %v531 = vadd.f32 0.0, %v530
        %v532 = vpop.f32.mrb[0].mxu0
        %v533 = vpop.f32.mrb[0].mxu0
        %v534 = vadd.f32 0.0, %v533
        %v535 = vpop.f32.mrb[0].mxu0
        %536 = vmatprep.mubr.bf16.mxu0 %v347
        %537 = vmatmul.mubr.bf16.gmra.mrb[0].mxu0 %v346
        %v538 = vpop.f32.mrb[0].mxu0
        %v539 = vadd.f32 0.0, %v538
        %v540 = vpop.f32.mrb[0].mxu0
        %v541 = vpop.f32.mrb[0].mxu0
        %v542 = vadd.f32 0.0, %v541
        %v543 = vpop.f32.mrb[0].mxu0
        %544 = vmatprep.mubr.bf16.mxu0 %v349
        %545 = vmatmul.mubr.bf16.gmra.mrb[0].mxu0 %v348
        %v546 = vpop.f32.mrb[0].mxu0
        %v547 = vadd.f32 0.0, %v546
        %v548 = vpop.f32.mrb[0].mxu0
        %v549 = vpop.f32.mrb[0].mxu0
        %v550 = vadd.f32 0.0, %v549
        %v551 = vpop.f32.mrb[0].mxu0
        %552 = vmatprep.mubr.bf16.mxu0 %v351
        %553 = vmatmul.mubr.bf16.gmra.mrb[0].mxu0 %v350
        %v554 = vpop.f32.mrb[0].mxu0
        %v555 = vadd.f32 0.0, %v554
        %v556 = vpop.f32.mrb[0].mxu0
        %v557 = vpop.f32.mrb[0].mxu0
        %v558 = vadd.f32 0.0, %v557
        %v559 = vpop.f32.mrb[0].mxu0
        %560 = vdwg.mxu0
        %v561 = vld [vmem:[%s236] sm:$0xff]
        %v562 = vld [vmem:[%s236 + $0x8] sm:$0xff]
        %v563 = vld [vmem:[%s236 + $0x10] sm:$0xff]
        %v564 = vld [vmem:[%s236 + $0x18] sm:$0xff]
        %v565 = vld [vmem:[%s236 + $0x20] sm:$0xff]
        %v566 = vld [vmem:[%s236 + $0x28] sm:$0xff]
        %v567 = vld [vmem:[%s236 + $0x30] sm:$0xff]
        %v568 = vld [vmem:[%s236 + $0x38] sm:$0xff]
        %v569 = vld [vmem:[%s236 + $0x40] sm:$0xff]
        %v570 = vld [vmem:[%s236 + $0x48] sm:$0xff]
        %v571 = vld [vmem:[%s236 + $0x50] sm:$0xff]
        %v572 = vld [vmem:[%s236 + $0x58] sm:$0xff]
        %v573 = vld [vmem:[%s236 + $0x60] sm:$0xff]
        %v574 = vld [vmem:[%s236 + $0x68] sm:$0xff]
        %v575 = vld [vmem:[%s236 + $0x70] sm:$0xff]
        %v576 = vld [vmem:[%s236 + $0x78] sm:$0xff]
        %578 = vset.pattern.permute.xlu0 0
        %579 = vperm.xlu0 %578, %v561
        %v580 = vpop.permute.xlu0 %579
        %583 = vset.pattern.permute.xlu0 0
        %584 = vperm.xlu0 %583, %v562
        %v585 = vpop.permute.xlu0 %584
        %588 = vset.pattern.permute.xlu0 0
        %589 = vperm.xlu0 %588, %v563
        %v590 = vpop.permute.xlu0 %589
        %593 = vset.pattern.permute.xlu0 0
        %594 = vperm.xlu0 %593, %v564
        %v595 = vpop.permute.xlu0 %594
        %598 = vset.pattern.permute.xlu0 0
        %599 = vperm.xlu0 %598, %v565
        %v600 = vpop.permute.xlu0 %599
        %603 = vset.pattern.permute.xlu0 0
        %604 = vperm.xlu0 %603, %v566
        %v605 = vpop.permute.xlu0 %604
        %608 = vset.pattern.permute.xlu0 0
        %609 = vperm.xlu0 %608, %v567
        %v610 = vpop.permute.xlu0 %609
        %613 = vset.pattern.permute.xlu0 0
        %614 = vperm.xlu0 %613, %v568
        %v615 = vpop.permute.xlu0 %614
        %618 = vset.pattern.permute.xlu0 0
        %619 = vperm.xlu0 %618, %v569
        %v620 = vpop.permute.xlu0 %619
        %623 = vset.pattern.permute.xlu0 0
        %624 = vperm.xlu0 %623, %v570
        %v625 = vpop.permute.xlu0 %624
        %628 = vset.pattern.permute.xlu0 0
        %629 = vperm.xlu0 %628, %v571
        %v630 = vpop.permute.xlu0 %629
        %633 = vset.pattern.permute.xlu0 0
        %634 = vperm.xlu0 %633, %v572
        %v635 = vpop.permute.xlu0 %634
        %638 = vset.pattern.permute.xlu0 0
        %639 = vperm.xlu0 %638, %v573
        %v640 = vpop.permute.xlu0 %639
        %643 = vset.pattern.permute.xlu0 0
        %644 = vperm.xlu0 %643, %v574
        %v645 = vpop.permute.xlu0 %644
        %648 = vset.pattern.permute.xlu0 0
        %649 = vperm.xlu0 %648, %v575
        %v650 = vpop.permute.xlu0 %649
        %653 = vset.pattern.permute.xlu0 0
        %654 = vperm.xlu0 %653, %v576
        %v655 = vpop.permute.xlu0 %654
        %v657 = vmul.f32 %v580, %v499
        %v658 = vmul.f32 %v585, %v502
        %v659 = vmul.f32 %v590, %v507
        %v660 = vmul.f32 %v595, %v510
        %v661 = vmul.f32 %v600, %v515
        %v662 = vmul.f32 %v605, %v518
        %v663 = vmul.f32 %v610, %v523
        %v664 = vmul.f32 %v615, %v526
        %v665 = vmul.f32 %v620, %v531
        %v666 = vmul.f32 %v625, %v534
        %v667 = vmul.f32 %v630, %v539
        %v668 = vmul.f32 %v635, %v542
        %v669 = vmul.f32 %v640, %v547
        %v670 = vmul.f32 %v645, %v550
        %v671 = vmul.f32 %v650, %v555
        %v672 = vmul.f32 %v655, %v558
        %v673 = vld [vmem:[%s3] sm:$0x1]
        %v675 = vlaneseq
        %v676 = vshrl.u32 %v675, 7
        %v677 = vsub.s32 0, %v676
        %v678 = vrot.slane %v673, %v677
        %v680 = vadd.f32 %v657, %v678
        %v681 = vadd.f32 %v658, %v678
        %v682 = vadd.f32 %v659, %v678
        %v683 = vadd.f32 %v660, %v678
        %v684 = vadd.f32 %v661, %v678
        %v685 = vadd.f32 %v662, %v678
        %v686 = vadd.f32 %v663, %v678
        %v687 = vadd.f32 %v664, %v678
        %v688 = vadd.f32 %v665, %v678
        %v689 = vadd.f32 %v666, %v678
        %v690 = vadd.f32 %v667, %v678
        %v691 = vadd.f32 %v668, %v678
        %v692 = vadd.f32 %v669, %v678
        %v693 = vadd.f32 %v670, %v678
        %v694 = vadd.f32 %v671, %v678
        %v695 = vadd.f32 %v672, %v678
        %v696 = vmax.f32 %v680, 0.0
        %v697 = vmax.f32 %v681, 0.0
        %v698 = vmax.f32 %v682, 0.0
        %v699 = vmax.f32 %v683, 0.0
        %v700 = vmax.f32 %v684, 0.0
        %v701 = vmax.f32 %v685, 0.0
        %v702 = vmax.f32 %v686, 0.0
        %v703 = vmax.f32 %v687, 0.0
        %v704 = vmax.f32 %v688, 0.0
        %v705 = vmax.f32 %v689, 0.0
        %v706 = vmax.f32 %v690, 0.0
        %v707 = vmax.f32 %v691, 0.0
        %v708 = vmax.f32 %v692, 0.0
        %v709 = vmax.f32 %v693, 0.0
        %v710 = vmax.f32 %v694, 0.0
        %v711 = vmax.f32 %v695, 0.0
        %v712 = vmul.f32 %v580, %v696
        %v713 = vmul.f32 %v585, %v697
        %v714 = vmul.f32 %v590, %v698
        %v715 = vmul.f32 %v595, %v699
        %v716 = vmul.f32 %v600, %v700
        %v717 = vmul.f32 %v605, %v701
        %v718 = vmul.f32 %v610, %v702
        %v719 = vmul.f32 %v615, %v703
        %v720 = vmul.f32 %v620, %v704
        %v721 = vmul.f32 %v625, %v705
        %v722 = vmul.f32 %v630, %v706
        %v723 = vmul.f32 %v635, %v707
        %v724 = vmul.f32 %v640, %v708
        %v725 = vmul.f32 %v645, %v709
        %v726 = vmul.f32 %v650, %v710
        %v727 = vmul.f32 %v655, %v711
        %728 = vst [vmem:[%s224] sm:$0xff] %v712
        %729 = vst [vmem:[%s224 + $0x8] sm:$0xff] %v713
        %730 = vst [vmem:[%s224 + $0x10] sm:$0xff] %v714
        %731 = vst [vmem:[%s224 + $0x18] sm:$0xff] %v715
        %732 = vst [vmem:[%s224 + $0x20] sm:$0xff] %v716
        %733 = vst [vmem:[%s224 + $0x28] sm:$0xff] %v717
        %734 = vst [vmem:[%s224 + $0x30] sm:$0xff] %v718
        %735 = vst [vmem:[%s224 + $0x38] sm:$0xff] %v719
        %736 = vst [vmem:[%s224 + $0x40] sm:$0xff] %v720
        %737 = vst [vmem:[%s224 + $0x48] sm:$0xff] %v721
        %738 = vst [vmem:[%s224 + $0x50] sm:$0xff] %v722
        %739 = vst [vmem:[%s224 + $0x58] sm:$0xff] %v723
        %740 = vst [vmem:[%s224 + $0x60] sm:$0xff] %v724
        %741 = vst [vmem:[%s224 + $0x68] sm:$0xff] %v725
        %742 = vst [vmem:[%s224 + $0x70] sm:$0xff] %v726
        %743 = vst [vmem:[%s224 + $0x78] sm:$0xff] %v727
        %s744 = sand.u32 %s121, 1
        %s745 = scalar_lea.sflag [#allocation4], %s744
        %s746 = sand.u32 %s121, 1
        %s747 = smul.addr %s746, 128
        %s748 = scalar_lea.vmem [#allocation5], %s747
        // Predicated region
        $region41: #{tpu_custom_call.1} parent=35 // pred_check
          %p749 = pneg %p131
        $region42: #{tpu_custom_call.1} parent=35 // pred_check_branch
          %751 = sbr.rel (%p749) target = $region44
        $region43: #{tpu_custom_call.1} parent=35 // pred_region
          %s752 = smul.u32 16, %s19
          %s754 = ssub.s32 2048, 2048
          %755 = vsyncadd %s745, %s754
          %s756 = smul.addr %s752, 128
          %s757 = scalar_lea.hbm %s4, %s756
          %s758 = sshll.u32 %s748, 4
          %s759 = int_to_ptr.vmem [resolvable:$true] %s758
          %764 = dma.vmem_to_hbm [thread:$0]  %s759, 2048, %s757, %s745, 128, 128, 8
        $region44: #{tpu_custom_call.1} parent=35 // pred_fallthru
          _
      $region36: #{tpu_custom_call.1} parent=5 // pred_fallthru
        _
      %p765 = scmp.le.s32.totalorder 2, %s14
      // Predicated region
      $region45: #{tpu_custom_call.1} parent=5 // pred_check
        %p766 = pneg %p765
      $region46: #{tpu_custom_call.1} parent=5 // pred_check_branch
        %768 = sbr.rel (%p766) target = $region48
      $region47: #{tpu_custom_call.1} parent=5 // pred_region
        %s769 = ssub.s32 %s14, 2
        // Predicated region
        $region49: #{tpu_custom_call.1} parent=47 // pred_check
          %p770 = pneg %p137
        $region50: #{tpu_custom_call.1} parent=47 // pred_check_branch
          %772 = sbr.rel (%p770) target = $region52
        $region51: #{tpu_custom_call.1} parent=47 // pred_region
          %s773 = sand.u32 %s122, 1
          %s774 = scalar_lea.sflag [#allocation4], %s773
          %s775 = sand.u32 %s122, 1
          %s776 = smul.addr %s775, 128
          %s777 = scalar_lea.vmem [#allocation5], %s776
          %778 = dma.done %s774, 2048
        $region52: #{tpu_custom_call.1} parent=47 // pred_fallthru
          _
      $region48: #{tpu_custom_call.1} parent=5 // pred_fallthru
        _
    $region6: #{tpu_custom_call.1} parent=1 // loop_footer
      %s18 = sadd.s32 1, %s14
    $region7: #{tpu_custom_call.1} parent=1 // loop_footer_branch
      %13 = sbr.rel target = $region3
    $region8: #{tpu_custom_call.1} parent=1 // loop_exit
      _
    %779 = vsyncpa [#allocation3], 1
    %s780 = scalar_lea.sflag [#allocation3], 1
    %781 = vsyncpa %s780, 1
    %782 = vsyncpa [#allocation4], 1
    %s783 = scalar_lea.sflag [#allocation4], 1
    %784 = vsyncpa %s783, 1

</llo_original>
